<compile_context>
chip_gen: v5e
topology: v5e:2x2
jax: 0.10.0
libtpu: 0.0.40
codegen_flags: <defaults>
</compile_context>

<pallas_src>
import numpy as np
import jax
import jax.numpy as jnp
from jax.experimental import pallas as pl
from jax.experimental.pallas import tpu as pltpu


def _shuffle_matmul_kernel(onehot_ref, x_ref, out_ref):
    """out[:, j] = x[:, perm[j]] via one-hot matmul on the MXU.

    onehot_ref : (D_pad, TN)  precomputed permutation one-hot slice (input dtype)
    x_ref      : (TB, D_pad)  batch tile of (zero-padded) inputs
    out_ref    : (TB, TN)     batch x output-column tile
    """
    out_ref[...] = jnp.dot(
        x_ref[...], onehot_ref[...], preferred_element_type=jnp.float32
    ).astype(out_ref.dtype)


def _round_up(x, m):
    return -(-x // m) * m


def _vmem_capacity_bytes():
    """Physical VMEM per TensorCore; conservative 64 MiB (v7x) if unknown."""
    try:
        info = pltpu.get_tpu_info()
        cap = int(getattr(info, "vmem_capacity_bytes", 0) or 0)
        if cap > 0:
            return cap
    except Exception:
        pass
    return 64 * 1024 * 1024


class ShufflePallas:
    """Pallas TPU equivalent of the RealNVP `Shuffle` module."""

    def __init__(self, num_inputs, seed=0):
        rng = np.random.default_rng(seed)
        self.perm = rng.permutation(num_inputs).astype(np.int32)
        self.inv_perm = np.argsort(self.perm).astype(np.int32)
        self.num_inputs = int(num_inputs)
        # Lane-pad the feature dim to a multiple of 128: full MXU tiles,
        # unmasked (lane-dense) stores.  Padded lanes map to themselves and
        # carry zeros end-to-end.
        self.d_pad = max(128, _round_up(self.num_inputs, 128))

        def padded_onehot(perm):
            perm_pad = np.concatenate(
                [perm.astype(np.int64), np.arange(self.num_inputs, self.d_pad)])
            p = np.zeros((self.d_pad, self.d_pad), dtype=np.float32)
            # P[perm[j], j] = 1  =>  (x @ P)[:, j] = x[:, perm[j]]
            p[perm_pad, np.arange(self.d_pad)] = 1.0
            return p

        self._onehot_np = {
            "direct": padded_onehot(self.perm),
            "inverse": padded_onehot(self.inv_perm),
        }
        self._onehot_cache = {}

    # ------------------------------------------------------------------ utils

    def _onehot_for(self, mode, dtype):
        key = (mode, jnp.dtype(dtype).name)
        if key not in self._onehot_cache:
            self._onehot_cache[key] = jnp.asarray(self._onehot_np[mode], dtype=dtype)
        return self._onehot_cache[key]

    def _pick_tiles(self, b, d_pad, itemsize, vmem_cap):
        """Size (TB, TN) from the actual VMEM capacity, counting everything."""
        # ~60% of physical VMEM for the working set:
        #   v5e/v6e (128 MiB) -> ~76 MiB, v7x (64 MiB) -> ~38 MiB.
        budget = (vmem_cap * 3) // 5

        def onehot_bytes(tn):           # double-buffered one-hot column slice
            return 2 * d_pad * tn * itemsize

        # Output-column tile: keep the one-hot slice under half the budget so
        # the VMEM footprint never scales with D^2.
        if onehot_bytes(d_pad) <= budget // 2:
            tn = d_pad
        elif d_pad > 512 and onehot_bytes(512) <= budget // 2:
            tn = 512
        elif d_pad > 256 and onehot_bytes(256) <= budget // 2:
            tn = 256
        else:
            tn = 128

        # Batch tile: double-buffered x and out streams + f32 dot result.
        row_bytes = 2 * d_pad * itemsize + 2 * tn * itemsize + tn * 4
        remaining = max(budget - onehot_bytes(tn), 8 * row_bytes)
        tb = int(max(8, min(1024, (remaining // row_bytes) // 8 * 8)))

        if tb >= b:
            if b >= 16:
                # Split into >= 2 batch tiles so both v7x TensorCores get work.
                tb = min(_round_up(-(-b // 2), 8), b)
            else:
                tb = b  # single block equal to the full batch dim (legal)
        return tb, tn

    # --------------------------------------------------------------- forward

    def __call__(self, inputs, mode="direct", force_kernel=False):
        b, d = inputs.shape
        assert d == self.num_inputs
        perm = self.perm if mode == "direct" else self.inv_perm
        logdet = jnp.zeros((b, 1), dtype=jnp.float32)

        # Integer / non-float dtypes must not take the float-MXU path.
        if not jnp.issubdtype(inputs.dtype, jnp.floating):
            return inputs[:, perm], logdet

        itemsize = jnp.dtype(inputs.dtype).itemsize
        tiny = d <= 128 and b * d * itemsize <= 512 * 1024
        if tiny and not force_kernel:
            # Launch / per-step overhead would dominate; static gather wins.
            return inputs[:, perm], logdet

        d_pad = self.d_pad
        x = inputs if d_pad == d else jnp.pad(inputs, ((0, 0), (0, d_pad - d)))
        onehot = self._onehot_for(mode, inputs.dtype)

        vmem_cap = _vmem_capacity_bytes()
        tb, tn = self._pick_tiles(b, d_pad, itemsize, vmem_cap)
        grid = (pl.cdiv(b, tb), pl.cdiv(d_pad, tn))

        out_pad = pl.pallas_call(
            _shuffle_matmul_kernel,
            out_shape=jax.ShapeDtypeStruct((b, d_pad), inputs.dtype),
            grid=grid,
            in_specs=[
                # One-hot column slice: index depends only on the inner column
                # axis; when tn == d_pad it is fetched once and stays resident.
                pl.BlockSpec((d_pad, tn), lambda i, j: (0, j)),
                # x batch tile: constant along the inner column axis, so it is
                # DMA'd once per batch step.
                pl.BlockSpec((tb, d_pad), lambda i, j: (i, 0)),
            ],
            out_specs=pl.BlockSpec((tb, tn), lambda i, j: (i, j)),
            compiler_params=pltpu.CompilerParams(
                dimension_semantics=("parallel", "arbitrary"),
                # v5e/v6e (128 MiB) -> 96 MiB; v7x (64 MiB) -> 48 MiB.
                vmem_limit_bytes=int(min((vmem_cap * 3) // 4, 96 * 1024 * 1024)),
            ),
        )(onehot, x)

        out = out_pad if d_pad == d else out_pad[:, :d]
        return out, logdet


if __name__ == "__main__":
    # Small shapes consistent with the module: batch=2, num_inputs=32.
    B, D = 2, 32
    key = jax.random.PRNGKey(0)
    x = jax.random.normal(key, (B, D), dtype=jnp.float32)

    layer = ShufflePallas(D, seed=0)

    # Force the Pallas kernel even at this tiny shape so the kernel path runs.
    out_d, logdet_d = layer(x, mode="direct", force_kernel=True)
    out_i, _ = layer(out_d, mode="inverse", force_kernel=True)
    jax.block_until_ready((out_d, logdet_d, out_i))

    ref_d = np.asarray(x)[:, layer.perm]
    np.testing.assert_allclose(np.asarray(out_d), ref_d, rtol=0, atol=0)
    np.testing.assert_allclose(np.asarray(logdet_d), np.zeros((B, 1), np.float32))
    np.testing.assert_allclose(np.asarray(out_i), np.asarray(x), rtol=0, atol=0)

    # Auto-dispatch fast path (static gather) at the tiny shape.
    out_f, _ = layer(x, mode="direct")
    jax.block_until_ready(out_f)
    np.testing.assert_allclose(np.asarray(out_f), ref_d, rtol=0, atol=0)

    # Larger batch exercising the tiled / pipelined / megacore-split kernel
    # path (>= 2 batch grid steps).
    B2 = 2048
    x2 = jax.random.normal(jax.random.PRNGKey(0), (B2, D), dtype=jnp.float32)
    out2, _ = layer(x2, mode="direct", force_kernel=True)
    out2_inv, _ = layer(out2, mode="inverse", force_kernel=True)
    jax.block_until_ready((out2, out2_inv))
    np.testing.assert_allclose(np.asarray(out2), np.asarray(x2)[:, layer.perm],
                               rtol=0, atol=0)
    np.testing.assert_allclose(np.asarray(out2_inv), np.asarray(x2), rtol=0, atol=0)

    print("KERNEL_OK")
</pallas_src>

<mosaic_0001>
module attributes {stable_mosaic.version = 11 : i64} {
  func.func @_shuffle_matmul_kernel(%arg0: i32, %arg1: i32, %arg2: memref<128x128xf32, #tpu.memory_space<vmem>>, %arg3: memref<2x128xf32, #tpu.memory_space<vmem>>, %arg4: memref<2x128xf32, #tpu.memory_space<vmem>>) attributes {dimension_semantics = [#tpu.dimension_semantics<parallel>, #tpu.dimension_semantics<arbitrary>], iteration_bounds = array<i64: 1, 1>, scalar_prefetch = 0 : i64, scratch_operands = 0 : i64, tpu.core_type = #tpu.core_type<tc>, window_params = [{transform_indices = @transform_0, window_bounds = array<i64: 128, 128>}, {transform_indices = @transform_1, window_bounds = array<i64: 2, 128>}, {transform_indices = @transform_2, window_bounds = array<i64: 2, 128>}]} {
    %c0 = arith.constant 0 : index
    %c0_0 = arith.constant 0 : index
    %0 = vector.load %arg3[%c0, %c0_0] : memref<2x128xf32, #tpu.memory_space<vmem>>, vector<2x128xf32>
    %c0_1 = arith.constant 0 : index
    %c0_2 = arith.constant 0 : index
    %1 = vector.load %arg2[%c0_1, %c0_2] : memref<128x128xf32, #tpu.memory_space<vmem>>, vector<128x128xf32>
    %cst = arith.constant dense<0.000000e+00> : vector<2x128xf32>
    %2 = tpu.matmul %0, %1, %cst {dimension_numbers = #tpu.dot_dimension_numbers<[1], [0], [0], [1], [0, 0, 1, 1], [], []>} : vector<2x128xf32>, vector<128x128xf32>, vector<2x128xf32> -> vector<2x128xf32>
    %c0_3 = arith.constant 0 : index
    %c0_4 = arith.constant 0 : index
    %3 = vector.load %arg4[%c0_3, %c0_4] : memref<2x128xf32, #tpu.memory_space<vmem>>, vector<2x128xf32>
    tpu.vector_store %arg4[%c0_3, %c0_4], %2 {strides = array<i32>} : memref<2x128xf32, #tpu.memory_space<vmem>>, vector<2x128xf32>,
    return
  }
  func.func @transform_0(%arg0: i32, %arg1: i32) -> (i32, i32) {
    %c0_i32 = arith.constant 0 : i32
    %c0_i32_0 = arith.constant 0 : i32
    return %c0_i32, %arg1 : i32, i32
  }
  func.func @transform_1(%arg0: i32, %arg1: i32) -> (i32, i32) {
    %c0_i32 = arith.constant 0 : i32
    %c0_i32_0 = arith.constant 0 : i32
    return %arg0, %c0_i32 : i32, i32
  }
  func.func @transform_2(%arg0: i32, %arg1: i32) -> (i32, i32) {
    %c0_i32 = arith.constant 0 : i32
    return %arg0, %arg1 : i32, i32
  }
}

</mosaic_0001>

<llo_original>
// kernel: tpu_custom_call.1
$region0: #{tpu_custom_call.1}
  #allocation0 [shape = 'u32[]', space=smem, size = 0x4, offset = 0x4, fixed_abs, tag = 'smem constant byte address 0x4 - core index']
  #allocation1 [shape = 'u32[72,128]{1,0:T(1,128)}', space=vmem, size = 0x9000, scoped, tag = 'internal scratch']
  %s0 = inlined_call_operand.hbm [shape: f32[128,128], index: 0, kind: input, shape index: {}]
  %s1 = inlined_call_operand.hbm [shape: f32[2,128], index: 1, kind: input, shape index: {}]
  %s2 = inlined_call_operand.hbm [shape: f32[2,128], index: 2, kind: output, shape index: {}]
  %s3 = sld [smem:[#allocation0]]
  $region26: #{tpu_custom_call.1} parent=0
    _
  %s5 = ssub.s32 1, %s3
  %s6 = scalar_select 0, %s5, %s3
  $region1: #{tpu_custom_call.1} parent=0
    #allocation2 [shape = 'u8[65536]{0}', space=vmem, size = 0x10000, scoped, tag = 'input window, operand 0, single buffered']
    #allocation3 [shape = 's32[1]{0}', space=sflag, size = 0x4, scoped, tag = 'scoped memory for tpu_custom_call.1']
    #allocation4 [shape = 's32[1]{0}', space=sflag, size = 0x4, scoped, tag = 'scoped memory for tpu_custom_call.1']
    #allocation5 [shape = 'u8[1024]{0}', space=vmem, size = 0x400, scoped, tag = 'input window, operand 1, single buffered']
    #allocation6 [shape = 's32[1]{0}', space=sflag, size = 0x4, scoped, tag = 'scoped memory for tpu_custom_call.1']
    #allocation7 [shape = 'u8[1024]{0}', space=vmem, size = 0x400, scoped, tag = 'output window, operand 0, single buffered']
    %7 = vsyncpa [#allocation3], 0
    %8 = vsyncpa [#allocation6], 0
    %9 = vsyncpa [#allocation4], 0
    // Predicated region
    $region2: #{tpu_custom_call.1} parent=1 // pred_check
      _
    $region3: #{tpu_custom_call.1} parent=1 // pred_check_branch
      %11 = sbr.rel (0) target = $region5
    $region4: #{tpu_custom_call.1} parent=1 // pred_region
      %13 = vsyncadd [#allocation3], 0
      %s14 = sshll.u32 %s0, 4
      %s15 = int_to_ptr.hbm [resolvable:$true] %s14
      %s16 = sshll.u32 [#allocation2], 4
      %s17 = int_to_ptr.vmem [resolvable:$true] %s16
      %22 = dma.hbm_to_vmem [thread:$0]  %s15, 2048, %s17, [#allocation3], 128, 128, 8
    $region5: #{tpu_custom_call.1} parent=1 // pred_fallthru
      _
    // Predicated region
    $region6: #{tpu_custom_call.1} parent=1 // pred_check
      _
    $region7: #{tpu_custom_call.1} parent=1 // pred_check_branch
      %24 = sbr.rel (0) target = $region9
    $region8: #{tpu_custom_call.1} parent=1 // pred_region
      %26 = vsyncadd [#allocation6], 0
      %s28 = sshll.u32 %s1, 4
      %s29 = int_to_ptr.hbm [resolvable:$true] %s28
      %s30 = sshll.u32 [#allocation5], 4
      %s31 = int_to_ptr.vmem [resolvable:$true] %s30
      %33 = dma.hbm_to_vmem [thread:$0]  %s29, 32, %s31, [#allocation6]
    $region9: #{tpu_custom_call.1} parent=1 // pred_fallthru
      _
    // Predicated region
    $region10: #{tpu_custom_call.1} parent=1 // pred_check
      _
    $region11: #{tpu_custom_call.1} parent=1 // pred_check_branch
      %35 = sbr.rel (0) target = $region13
    $region12: #{tpu_custom_call.1} parent=1 // pred_region
      %37 = dma.done [#allocation3], 2048
    $region13: #{tpu_custom_call.1} parent=1 // pred_fallthru
      _
    // Predicated region
    $region14: #{tpu_custom_call.1} parent=1 // pred_check
      _
    $region15: #{tpu_custom_call.1} parent=1 // pred_check_branch
      %39 = sbr.rel (0) target = $region17
    $region16: #{tpu_custom_call.1} parent=1 // pred_region
      %41 = dma.done [#allocation6], 32
    $region17: #{tpu_custom_call.1} parent=1 // pred_fallthru
      _
    %v42 = vld [vmem:[#allocation5] sm:$0x3]
    %v43 = vld [vmem:[#allocation2] sm:$0xff]
    %v44 = vld [vmem:[#allocation2 + $0x8] sm:$0xff]
    %v45 = vld [vmem:[#allocation2 + $0x10] sm:$0xff]
    %v46 = vld [vmem:[#allocation2 + $0x18] sm:$0xff]
    %v47 = vld [vmem:[#allocation2 + $0x20] sm:$0xff]
    %v48 = vld [vmem:[#allocation2 + $0x28] sm:$0xff]
    %v49 = vld [vmem:[#allocation2 + $0x30] sm:$0xff]
    %v50 = vld [vmem:[#allocation2 + $0x38] sm:$0xff]
    %v51 = vld [vmem:[#allocation2 + $0x40] sm:$0xff]
    %v52 = vld [vmem:[#allocation2 + $0x48] sm:$0xff]
    %v53 = vld [vmem:[#allocation2 + $0x50] sm:$0xff]
    %v54 = vld [vmem:[#allocation2 + $0x58] sm:$0xff]
    %v55 = vld [vmem:[#allocation2 + $0x60] sm:$0xff]
    %v56 = vld [vmem:[#allocation2 + $0x68] sm:$0xff]
    %v57 = vld [vmem:[#allocation2 + $0x70] sm:$0xff]
    %v58 = vld [vmem:[#allocation2 + $0x78] sm:$0xff]
    %59 = vmatpush.msra.mxu0 %v58
    %60 = vmatpush.msra.mxu0 %v57
    %61 = vmatpush.msra.mxu0 %v56
    %62 = vmatpush.msra.mxu0 %v55
    %63 = vmatpush.msra.mxu0 %v54
    %64 = vmatpush.msra.mxu0 %v53
    %65 = vmatpush.msra.mxu0 %v52
    %66 = vmatpush.msra.mxu0 %v51
    %67 = vmatpush.msra.mxu0 %v50
    %68 = vmatpush.msra.mxu0 %v49
    %69 = vmatpush.msra.mxu0 %v48
    %70 = vmatpush.msra.mxu0 %v47
    %71 = vmatpush.msra.mxu0 %v46
    %72 = vmatpush.msra.mxu0 %v45
    %73 = vmatpush.msra.mxu0 %v44
    %74 = vmatpush.msra.mxu0 %v43
    %75 = vmatmul.f32.gmra.mxu0 %v42
    %v76 = vpop.f32.mrf.mxu0
    %v77 = vadd.f32 0.0, %v76
    %78 = vdwg.mxu0
    %79 = vst [vmem:[#allocation7] sm:$0x3] %v77
    // Predicated region
    $region18: #{tpu_custom_call.1} parent=1 // pred_check
      _
    $region19: #{tpu_custom_call.1} parent=1 // pred_check_branch
      %81 = sbr.rel (0) target = $region21
    $region20: #{tpu_custom_call.1} parent=1 // pred_region
      %83 = vsyncadd [#allocation4], 0
      %s85 = sshll.u32 [#allocation7], 4
      %s86 = int_to_ptr.vmem [resolvable:$true] %s85
      %s87 = sshll.u32 %s2, 4
      %s88 = int_to_ptr.hbm [resolvable:$true] %s87
      %90 = dma.vmem_to_hbm [thread:$0]  %s86, 32, %s88, [#allocation4]
    $region21: #{tpu_custom_call.1} parent=1 // pred_fallthru
      _
    // Predicated region
    $region22: #{tpu_custom_call.1} parent=1 // pred_check
      _
    $region23: #{tpu_custom_call.1} parent=1 // pred_check_branch
      %92 = sbr.rel (0) target = $region25
    $region24: #{tpu_custom_call.1} parent=1 // pred_region
      %94 = dma.done [#allocation4], 32
    $region25: #{tpu_custom_call.1} parent=1 // pred_fallthru
      _
    %95 = vsyncpa [#allocation3], 1
    %96 = vsyncpa [#allocation6], 1
    %97 = vsyncpa [#allocation4], 1

</llo_original>
